<compile_context>
chip_gen: v7x
topology: tpu7x:2x2x1
jax: 0.10.0
libtpu: 0.0.40
codegen_flags: <defaults>
</compile_context>

<pallas_src>
import functools
import math

import jax
import jax.numpy as jnp
from jax.experimental import pallas as pl
from jax.experimental.pallas import tpu as pltpu


# ----------------------------------------------------------------------------
# Pallas kernel: grid-accumulated sum reduction
# ----------------------------------------------------------------------------
def _sum_kernel(x_ref, out_ref, acc_ref, *, rows, tile_n, nb_per_core):
    # Grid = (parallel_halves, reduction_steps).  acc_ref is an (8, D) f32 VMEM
    # accumulator that lives across the sequential ("arbitrary") reduction
    # axis; each half gets its own accumulator and its own output slot, so the
    # "parallel" axis never races.
    p = pl.program_id(0)
    i = pl.program_id(1)

    @pl.when(i == 0)
    def _():
        acc_ref[...] = jnp.zeros_like(acc_ref)

    x = x_ref[...].astype(jnp.float32)

    # Mask rows past the true end of the un-padded input: the globally last
    # block may be a Pallas boundary block whose tail rows hold unspecified
    # data.  `rows`, `tile_n`, `nb_per_core` are Python ints at trace time.
    start = (p * nb_per_core + i) * tile_n
    row_ids = jax.lax.broadcasted_iota(jnp.int32, (tile_n, 1), 0) + start
    x = jnp.where(row_ids < rows, x, 0.0)

    # Fold the (tile_n, D) block into the (8, D) accumulator with pure VPU
    # vreg adds (the reshape splits exactly at 8-sublane group boundaries, so
    # it is a free view).  No per-step XLU reduce.
    acc_ref[...] += x.reshape(tile_n // 8, 8, x.shape[-1]).sum(axis=0)

    @pl.when(i == pl.num_programs(1) - 1)
    def _():
        # Single sublane+lane collapse and scalar SMEM store per core.
        out_ref[0, 0] = jnp.sum(acc_ref[...])


# ----------------------------------------------------------------------------
# Helpers
# ----------------------------------------------------------------------------
def _round_up(x: int, m: int) -> int:
    return ((x + m - 1) // m) * m


def _sublane_multiple(dtype) -> int:
    # f32/int32 -> 8, bf16/f16 -> 16, int8/fp8 -> 32 (packed sublane layouts).
    itemsize = jnp.dtype(dtype).itemsize
    return max(8, 32 // max(1, itemsize))


def _default_block_bytes() -> int:
    # 2 double-buffered input blocks must stay under the scoped-VMEM default:
    #   v5e: 16 MiB scoped  -> 4 MiB blocks (8 MiB buffered)
    #   v6e/v7x: 32 MiB scoped -> 8 MiB blocks (16 MiB buffered; v7x physical
    #   VMEM is 64 MiB, still ample margin).
    try:
        kind = jax.devices()[0].device_kind.lower()
    except Exception:  # pragma: no cover - defensive
        return 4 * 1024 * 1024
    if "v6" in kind or "v7" in kind:
        return 8 * 1024 * 1024
    return 4 * 1024 * 1024


# ----------------------------------------------------------------------------
# Wrapper: sum-reduce an arbitrary tensor to an f32 scalar
# ----------------------------------------------------------------------------
def pallas_sum(
    values: jax.Array,
    *,
    target_block_bytes: int | None = None,
    min_pallas_elements: int = 256 * 1024,
) -> jax.Array:
    """Sum-reduce a tensor to an f32 scalar with a Pallas TPU kernel."""
    values = jnp.asarray(values)
    flat = values.reshape(-1)  # row-major flatten: free reshape, no copy
    n_elems = int(flat.size)

    if n_elems == 0:
        return jnp.float32(0.0)
    if n_elems < min_pallas_elements or n_elems % 128 != 0:
        # Tiny inputs: pallas_call launch + DMA setup dominate.
        # n % 128 != 0: a lane-dense 2-D view would require a pad or
        # prefix-slice copy of ~the whole tensor (3x HBM traffic); XLA's fused
        # reduce is already near roofline for these shapes.
        # TODO(synk): in-kernel element-masked tail to cover n % 128 != 0.
        return jnp.sum(flat.astype(jnp.float32))

    # Lane width: the largest multiple of 128 (<= 2048) dividing n_elems, so
    # the 2-D view is a zero-copy reshape and every vreg / DMA row is
    # lane-dense (dense (8,128) vregs, contiguous DMA descriptors).
    d = 128 * math.gcd(n_elems // 128, 16)
    rows = n_elems // d
    x2 = flat.reshape(rows, d)  # free reshape, no copy

    itemsize = jnp.dtype(values.dtype).itemsize
    sub = _sublane_multiple(values.dtype)
    if target_block_bytes is None:
        target_block_bytes = _default_block_bytes()

    # Rows per block: target ~target_block_bytes per input block, rounded to
    # the dtype's sublane multiple, never more than the (rounded-up) row count.
    tile_n = max(sub, (target_block_bytes // (d * itemsize)) // sub * sub)
    tile_n = min(tile_n, _round_up(rows, sub))

    nb_total = pl.cdiv(rows, tile_n)
    # Split the row blocks across two TensorCores when they divide evenly
    # (one partial sum per core); harmless on 1-TC v5e/v6e.
    # TODO(synk): on v7x, verify 2-TC sharding in xprof and switch to
    # pltpu.CORE_PARALLEL if plain "parallel" does not shard.
    num_parallel = 2 if (nb_total >= 2 and nb_total % 2 == 0) else 1
    nb_per_core = nb_total // num_parallel

    kernel = functools.partial(
        _sum_kernel, rows=rows, tile_n=tile_n, nb_per_core=nb_per_core
    )

    partials = pl.pallas_call(
        kernel,
        out_shape=jax.ShapeDtypeStruct((num_parallel, 1), jnp.float32),
        grid_spec=pltpu.PrefetchScalarGridSpec(
            num_scalar_prefetch=0,
            grid=(num_parallel, nb_per_core),
            in_specs=[
                pl.BlockSpec(
                    (tile_n, d), lambda p, i: (p * nb_per_core + i, 0)
                )
            ],
            out_specs=pl.BlockSpec(
                (1, 1),
                lambda p, i: (p, 0),
                memory_space=pltpu.MemorySpace.SMEM,
            ),
            scratch_shapes=[pltpu.VMEM((8, d), jnp.float32)],
        ),
        compiler_params=pltpu.CompilerParams(
            # reduction axis must be sequential for the accumulator;
            # leading axis may be sharded across TensorCores.
            dimension_semantics=("parallel", "arbitrary"),
        ),
        cost_estimate=pl.CostEstimate(
            flops=n_elems,
            transcendentals=0,
            bytes_accessed=n_elems * itemsize + num_parallel * 4,
        ),
    )(x2)
    return jnp.sum(partials)


# ----------------------------------------------------------------------------
# Metric classes mirroring the PyTorch module structure
# ----------------------------------------------------------------------------
class Metric:
    """Abstract base — mirrors the PyTorch `Metric` forward contract."""

    def __init__(self, name):
        self.name = name

    def __call__(self, *args, **kwds):
        # forward(): update_state then result, exactly like the reference.
        self.update_state(*args, **kwds)
        return self.result()

    # TODO(synk): base-class reset/update_state/result are abstract
    # (NotImplementedError) in the reference; no compute to translate here.
    def reset(self):
        raise NotImplementedError

    def update_state(self, *args, **kwds):
        raise NotImplementedError

    def result(self):
        raise NotImplementedError


class MeanMetric(Metric):
    """Concrete running-mean metric; sum reduction runs in the Pallas kernel."""

    def __init__(self, name="mean"):
        super().__init__(name)
        self.reset()

    def reset(self):
        self._total = jnp.float32(0.0)
        self._count = jnp.float32(0.0)

    def update_state(self, values):
        values = jnp.asarray(values)
        self._total = self._total + pallas_sum(values)
        self._count = self._count + jnp.float32(values.size)

    def result(self):
        return self._total / jnp.maximum(self._count, jnp.float32(1.0))


# ----------------------------------------------------------------------------
# main
# ----------------------------------------------------------------------------
if __name__ == "__main__":
    key = jax.random.PRNGKey(0)
    k1, k2, k3 = jax.random.split(key, 3)

    # 1) MeanMetric forward on an f32 batch large enough (512*512 = 256K
    #    elements) to hit the Pallas path through the default threshold.
    v1 = jax.random.normal(k1, (512, 512), dtype=jnp.float32)
    metric = MeanMetric("mean")
    out1 = jax.block_until_ready(metric(v1))  # update_state(v1); result()
    ref1 = jnp.mean(v1)
    assert jnp.allclose(out1, ref1, rtol=1e-5, atol=1e-5), (out1, ref1)

    # 2) Running mean continues with a small, non-128-multiple batch
    #    (exercises the XLA fallback inside update_state; stays correct).
    v2 = jax.random.normal(k2, (300, 257), dtype=jnp.float32)
    out2 = jax.block_until_ready(metric(v2))
    ref2 = (jnp.sum(v1) + jnp.sum(v2)) / jnp.float32(v1.size + v2.size)
    assert jnp.allclose(out2, ref2, rtol=1e-5, atol=1e-5), (out2, ref2)

    # 3) Direct kernel test with a small block size to force a multi-step
    #    (2, nb) grid: 2-way parallel split + sequential accumulation + masked
    #    partial tail block (125 rows not a multiple of tile_n=8).
    v3 = jax.random.normal(k3, (1000, 256), dtype=jnp.float32)
    s3 = jax.block_until_ready(
        pallas_sum(v3, target_block_bytes=64 * 1024, min_pallas_elements=0)
    )
    ref3 = jnp.sum(v3)
    assert jnp.allclose(s3, ref3, rtol=1e-4, atol=5e-2), (s3, ref3)

    # 4) bf16 input (16-row packed sublane tiles), single-block grid.
    v4 = jax.random.normal(k1, (512, 512), dtype=jnp.bfloat16)
    s4 = jax.block_until_ready(pallas_sum(v4, min_pallas_elements=0))
    ref4 = jnp.sum(v4.astype(jnp.float32))
    assert jnp.allclose(s4, ref4, rtol=1e-4, atol=5e-2), (s4, ref4)

    print("KERNEL_OK")
</pallas_src>

<mosaic_0001>
module attributes {stable_mosaic.version = 11 : i64} {
  func.func @_sum_kernel(%arg0: i32, %arg1: i32, %arg2: memref<128x2048xf32, #tpu.memory_space<vmem>>, %arg3: memref<1x1xf32, #tpu.memory_space<smem>>, %arg4: memref<8x2048xf32, #tpu.memory_space<vmem>>) attributes {dimension_semantics = [#tpu.dimension_semantics<parallel>, #tpu.dimension_semantics<arbitrary>], iteration_bounds = array<i64: 1, 1>, scalar_prefetch = 0 : i64, scratch_operands = 1 : i64, tpu.core_type = #tpu.core_type<tc>, window_params = [{transform_indices = @transform_0, window_bounds = array<i64: 128, 2048>}, {transform_indices = @transform_1, window_bounds = array<i64: 1, 1>}]} {
    %c0_i32 = arith.constant 0 : i32
    %0 = arith.cmpi eq, %arg1, %c0_i32 : i32
    %1 = arith.extui %0 : i1 to i32
    %c0_i32_0 = arith.constant 0 : i32
    %2 = arith.cmpi ne, %1, %c0_i32_0 : i32
    scf.if %2 {
      %cst_10 = arith.constant 0.000000e+00 : f32
      %24 = vector.broadcast %cst_10 : f32 to vector<8x2048xf32>
      %c0_11 = arith.constant 0 : index
      %c0_12 = arith.constant 0 : index
      %25 = vector.load %arg4[%c0_11, %c0_12] : memref<8x2048xf32, #tpu.memory_space<vmem>>, vector<8x2048xf32>
      tpu.vector_store %arg4[%c0_11, %c0_12], %24 {strides = array<i32>} : memref<8x2048xf32, #tpu.memory_space<vmem>>, vector<8x2048xf32>,
    } else {
    }
    %c0 = arith.constant 0 : index
    %c0_1 = arith.constant 0 : index
    %3 = vector.load %arg2[%c0, %c0_1] : memref<128x2048xf32, #tpu.memory_space<vmem>>, vector<128x2048xf32>
    %c1_i32 = arith.constant 1 : i32
    %4 = arith.muli %arg0, %c1_i32 : i32
    %5 = arith.addi %4, %arg1 : i32
    %c128_i32 = arith.constant 128 : i32
    %6 = arith.muli %5, %c128_i32 : i32
    %7 = tpu.iota {dimensions = array<i32: 0>} : vector<128x1xi32>
    %8 = vector.broadcast %6 : i32 to vector<128x1xi32>
    %9 = arith.addi %7, %8 : vector<128x1xi32>
    %c128_i32_2 = arith.constant 128 : i32
    %10 = vector.broadcast %c128_i32_2 : i32 to vector<128x1xi32>
    %11 = arith.cmpi slt, %9, %10 : vector<128x1xi32>
    %cst = arith.constant 0.000000e+00 : f32
    %12 = vector.shape_cast %11 : vector<128x1xi1> to vector<128x1xi1>
    %13 = vector.broadcast %12 : vector<128x1xi1> to vector<128x2048xi1>
    %14 = vector.broadcast %cst : f32 to vector<128x2048xf32>
    %15 = arith.select %13, %3, %14 : vector<128x2048xi1>, vector<128x2048xf32>
    %c0_3 = arith.constant 0 : index
    %c0_4 = arith.constant 0 : index
    %16 = vector.load %arg4[%c0_3, %c0_4] : memref<8x2048xf32, #tpu.memory_space<vmem>>, vector<8x2048xf32>
    %17 = vector.shape_cast %15 : vector<128x2048xf32> to vector<16x8x2048xf32>
    %cst_5 = arith.constant dense<0.000000e+00> : vector<8x2048xf32>
    %18 = vector.multi_reduction <add>, %17, %cst_5 [0] : vector<16x8x2048xf32> to vector<8x2048xf32>
    %19 = arith.addf %16, %18 : vector<8x2048xf32>
    %c0_6 = arith.constant 0 : index
    %c0_7 = arith.constant 0 : index
    %20 = vector.load %arg4[%c0_6, %c0_7] : memref<8x2048xf32, #tpu.memory_space<vmem>>, vector<8x2048xf32>
    tpu.vector_store %arg4[%c0_6, %c0_7], %19 {strides = array<i32>} : memref<8x2048xf32, #tpu.memory_space<vmem>>, vector<8x2048xf32>,
    %c0_i32_8 = arith.constant 0 : i32
    %21 = arith.cmpi eq, %arg1, %c0_i32_8 : i32
    %22 = arith.extui %21 : i1 to i32
    %c0_i32_9 = arith.constant 0 : i32
    %23 = arith.cmpi ne, %22, %c0_i32_9 : i32
    scf.if %23 {
      %c0_10 = arith.constant 0 : index
      %c0_11 = arith.constant 0 : index
      %24 = vector.load %arg4[%c0_10, %c0_11] : memref<8x2048xf32, #tpu.memory_space<vmem>>, vector<8x2048xf32>
      %25 = vector.shape_cast %24 : vector<8x2048xf32> to vector<1x8x2048xf32>
      %cst_12 = arith.constant dense<0.000000e+00> : vector<1xf32>
      %26 = vector.multi_reduction <add>, %25, %cst_12 [1, 2] : vector<1x8x2048xf32> to vector<1xf32>
      %27 = vector.shape_cast %26 : vector<1xf32> to vector<1x1x1xf32>
      %28 = vector.extract %27[0, 0, 0] : f32 from vector<1x1x1xf32>
      %c0_13 = arith.constant 0 : index
      %c0_14 = arith.constant 0 : index
      %29 = memref.load %arg3[%c0_13, %c0_14] : memref<1x1xf32, #tpu.memory_space<smem>>
      memref.store %28, %arg3[%c0_13, %c0_14] : memref<1x1xf32, #tpu.memory_space<smem>>
    } else {
    }
    return
  }
  func.func @transform_0(%arg0: i32, %arg1: i32) -> (i32, i32) {
    %c1_i32 = arith.constant 1 : i32
    %0 = arith.muli %arg0, %c1_i32 : i32
    %1 = arith.addi %0, %arg1 : i32
    %c0_i32 = arith.constant 0 : i32
    %c0_i32_0 = arith.constant 0 : i32
    return %1, %c0_i32 : i32, i32
  }
  func.func @transform_1(%arg0: i32, %arg1: i32) -> (i32, i32) {
    %c0_i32 = arith.constant 0 : i32
    %c0_i32_0 = arith.constant 0 : i32
    return %arg0, %c0_i32 : i32, i32
  }
}

</mosaic_0001>

<llo_original>
// kernel: tpu_custom_call.1
$region0: #{tpu_custom_call.1}
  #allocation0 [shape = 'u32[]', space=smem, size = 0x4, offset = 0x4, fixed_abs, tag = 'smem constant byte address 0x4 - core index']
  #allocation1 [shape = 'u32[144,128]{1,0:T(1,128)}', space=vmem, size = 0x12000, scoped, tag = 'internal scratch']
  #allocation2 [shape = 'f32[8,2048]{1,0:T(8,128)}', space=vmem, size = 0x10000, scoped, tag = 'scratch operand']
  %s0 = inlined_call_operand.hbm [shape: f32[128,2048], index: 0, kind: input, shape index: {}]
  %s1 = inlined_call_operand.hbm [shape: f32[1,1], index: 1, kind: output, shape index: {}]
  %s2 = sld [smem:[#allocation0]]
  $region26: #{tpu_custom_call.1} parent=0
    _
  %s4 = ssub.s32 1, %s2
  %s5 = scalar_select 0, %s4, %s2
  $region1: #{tpu_custom_call.1} parent=0
    #allocation3 [shape = 'u8[1048576]{0}', space=vmem, size = 0x100000, scoped, tag = 'input window, operand 0, single buffered']
    #allocation4 [shape = 's32[1]{0}', space=sflag, size = 0x4, scoped, tag = 'scoped memory for tpu_custom_call.1']
    #allocation5 [shape = 's32[1]{0}', space=sflag, size = 0x4, scoped, tag = 'scoped memory for tpu_custom_call.1']
    #allocation6 [shape = 'u8[512]{0}', space=smem, size = 0x200, scoped, tag = 'output window, operand 0, single buffered']
    %6 = vsyncpa [#allocation4], 0
    %7 = vsyncpa [#allocation5], 0
    // Predicated region
    $region2: #{tpu_custom_call.1} parent=1 // pred_check
      _
    $region3: #{tpu_custom_call.1} parent=1 // pred_check_branch
      %9 = sbr.rel (0) target = $region5
    $region4: #{tpu_custom_call.1} parent=1 // pred_region
      %s10 = sadd.s32 0, 0
      %s11 = smul.u32 16, %s10
      %s13 = ssub.s32 32768, 32768
      %14 = vsyncadd [#allocation4], %s13
      %s15 = smul.addr %s11, 16
      %s16 = smul.addr %s15, 128
      %s17 = scalar_lea.hbm %s0, %s16
      %s18 = sshll.u32 [#allocation3], 4
      %s19 = int_to_ptr.vmem [resolvable:$true] %s18
      %24 = dma.hbm_to_vmem [thread:$0]  %s17, 32768, %s19, [#allocation4], 2048, 2048, 128
    $region5: #{tpu_custom_call.1} parent=1 // pred_fallthru
      _
    // Predicated region
    $region6: #{tpu_custom_call.1} parent=1 // pred_check
      _
    $region7: #{tpu_custom_call.1} parent=1 // pred_check_branch
      %26 = sbr.rel (0) target = $region9
    $region8: #{tpu_custom_call.1} parent=1 // pred_region
      %27 = dma.done [#allocation4], 32768
    $region9: #{tpu_custom_call.1} parent=1 // pred_fallthru
      _
    %s28 = sadd.s32 0, 0
    %s29 = smul.u32 16, %s28
    %p30 = scmp.eq.s32.totalorder 0, 0
    // Predicated region
    $region10: #{tpu_custom_call.1} parent=1 // pred_check
      %p31 = pneg %p30
    $region11: #{tpu_custom_call.1} parent=1 // pred_check_branch
      %33 = sbr.rel (%p31) target = $region13
    $region12: #{tpu_custom_call.1} parent=1 // pred_region
      %34 = vst [vmem:[#allocation2] sm:$0xff] 0.0
      %35 = vst [vmem:[#allocation2 + $0x8] sm:$0xff] 0.0
      %36 = vst [vmem:[#allocation2 + $0x10] sm:$0xff] 0.0
      %37 = vst [vmem:[#allocation2 + $0x18] sm:$0xff] 0.0
      %38 = vst [vmem:[#allocation2 + $0x20] sm:$0xff] 0.0
      %39 = vst [vmem:[#allocation2 + $0x28] sm:$0xff] 0.0
      %40 = vst [vmem:[#allocation2 + $0x30] sm:$0xff] 0.0
      %41 = vst [vmem:[#allocation2 + $0x38] sm:$0xff] 0.0
      %42 = vst [vmem:[#allocation2 + $0x40] sm:$0xff] 0.0
      %43 = vst [vmem:[#allocation2 + $0x48] sm:$0xff] 0.0
      %44 = vst [vmem:[#allocation2 + $0x50] sm:$0xff] 0.0
      %45 = vst [vmem:[#allocation2 + $0x58] sm:$0xff] 0.0
      %46 = vst [vmem:[#allocation2 + $0x60] sm:$0xff] 0.0
      %47 = vst [vmem:[#allocation2 + $0x68] sm:$0xff] 0.0
      %48 = vst [vmem:[#allocation2 + $0x70] sm:$0xff] 0.0
      %49 = vst [vmem:[#allocation2 + $0x78] sm:$0xff] 0.0
    $region13: #{tpu_custom_call.1} parent=1 // pred_fallthru
      _
    %v50 = vld [vmem:[#allocation3] sm:$0xff]
    %v51 = vld [vmem:[#allocation3 + $0x8] sm:$0xff]
    %v52 = vld [vmem:[#allocation3 + $0x10] sm:$0xff]
    %v53 = vld [vmem:[#allocation3 + $0x18] sm:$0xff]
    %v54 = vld [vmem:[#allocation3 + $0x20] sm:$0xff]
    %v55 = vld [vmem:[#allocation3 + $0x28] sm:$0xff]
    %v56 = vld [vmem:[#allocation3 + $0x30] sm:$0xff]
    %v57 = vld [vmem:[#allocation3 + $0x38] sm:$0xff]
    %v58 = vld [vmem:[#allocation3 + $0x40] sm:$0xff]
    %v59 = vld [vmem:[#allocation3 + $0x48] sm:$0xff]
    %v60 = vld [vmem:[#allocation3 + $0x50] sm:$0xff]
    %v61 = vld [vmem:[#allocation3 + $0x58] sm:$0xff]
    %v62 = vld [vmem:[#allocation3 + $0x60] sm:$0xff]
    %v63 = vld [vmem:[#allocation3 + $0x68] sm:$0xff]
    %v64 = vld [vmem:[#allocation3 + $0x70] sm:$0xff]
    %v65 = vld [vmem:[#allocation3 + $0x78] sm:$0xff]
    %v66 = vld [vmem:[#allocation3 + $0x80] sm:$0xff]
    %v67 = vld [vmem:[#allocation3 + $0x88] sm:$0xff]
    %v68 = vld [vmem:[#allocation3 + $0x90] sm:$0xff]
    %v69 = vld [vmem:[#allocation3 + $0x98] sm:$0xff]
    %v70 = vld [vmem:[#allocation3 + $0xa0] sm:$0xff]
    %v71 = vld [vmem:[#allocation3 + $0xa8] sm:$0xff]
    %v72 = vld [vmem:[#allocation3 + $0xb0] sm:$0xff]
    %v73 = vld [vmem:[#allocation3 + $0xb8] sm:$0xff]
    %v74 = vld [vmem:[#allocation3 + $0xc0] sm:$0xff]
    %v75 = vld [vmem:[#allocation3 + $0xc8] sm:$0xff]
    %v76 = vld [vmem:[#allocation3 + $0xd0] sm:$0xff]
    %v77 = vld [vmem:[#allocation3 + $0xd8] sm:$0xff]
    %v78 = vld [vmem:[#allocation3 + $0xe0] sm:$0xff]
    %v79 = vld [vmem:[#allocation3 + $0xe8] sm:$0xff]
    %v80 = vld [vmem:[#allocation3 + $0xf0] sm:$0xff]
    %v81 = vld [vmem:[#allocation3 + $0xf8] sm:$0xff]
    %v82 = vld [vmem:[#allocation3 + $0x100] sm:$0xff]
    %v83 = vld [vmem:[#allocation3 + $0x108] sm:$0xff]
    %v84 = vld [vmem:[#allocation3 + $0x110] sm:$0xff]
    %v85 = vld [vmem:[#allocation3 + $0x118] sm:$0xff]
    %v86 = vld [vmem:[#allocation3 + $0x120] sm:$0xff]
    %v87 = vld [vmem:[#allocation3 + $0x128] sm:$0xff]
    %v88 = vld [vmem:[#allocation3 + $0x130] sm:$0xff]
    %v89 = vld [vmem:[#allocation3 + $0x138] sm:$0xff]
    %v90 = vld [vmem:[#allocation3 + $0x140] sm:$0xff]
    %v91 = vld [vmem:[#allocation3 + $0x148] sm:$0xff]
    %v92 = vld [vmem:[#allocation3 + $0x150] sm:$0xff]
    %v93 = vld [vmem:[#allocation3 + $0x158] sm:$0xff]
    %v94 = vld [vmem:[#allocation3 + $0x160] sm:$0xff]
    %v95 = vld [vmem:[#allocation3 + $0x168] sm:$0xff]
    %v96 = vld [vmem:[#allocation3 + $0x170] sm:$0xff]
    %v97 = vld [vmem:[#allocation3 + $0x178] sm:$0xff]
    %v98 = vld [vmem:[#allocation3 + $0x180] sm:$0xff]
    %v99 = vld [vmem:[#allocation3 + $0x188] sm:$0xff]
    %v100 = vld [vmem:[#allocation3 + $0x190] sm:$0xff]
    %v101 = vld [vmem:[#allocation3 + $0x198] sm:$0xff]
    %v102 = vld [vmem:[#allocation3 + $0x1a0] sm:$0xff]
    %v103 = vld [vmem:[#allocation3 + $0x1a8] sm:$0xff]
    %v104 = vld [vmem:[#allocation3 + $0x1b0] sm:$0xff]
    %v105 = vld [vmem:[#allocation3 + $0x1b8] sm:$0xff]
    %v106 = vld [vmem:[#allocation3 + $0x1c0] sm:$0xff]
    %v107 = vld [vmem:[#allocation3 + $0x1c8] sm:$0xff]
    %v108 = vld [vmem:[#allocation3 + $0x1d0] sm:$0xff]
    %v109 = vld [vmem:[#allocation3 + $0x1d8] sm:$0xff]
    %v110 = vld [vmem:[#allocation3 + $0x1e0] sm:$0xff]
    %v111 = vld [vmem:[#allocation3 + $0x1e8] sm:$0xff]
    %v112 = vld [vmem:[#allocation3 + $0x1f0] sm:$0xff]
    %v113 = vld [vmem:[#allocation3 + $0x1f8] sm:$0xff]
    %v114 = vld [vmem:[#allocation3 + $0x200] sm:$0xff]
    %v115 = vld [vmem:[#allocation3 + $0x208] sm:$0xff]
    %v116 = vld [vmem:[#allocation3 + $0x210] sm:$0xff]
    %v117 = vld [vmem:[#allocation3 + $0x218] sm:$0xff]
    %v118 = vld [vmem:[#allocation3 + $0x220] sm:$0xff]
    %v119 = vld [vmem:[#allocation3 + $0x228] sm:$0xff]
    %v120 = vld [vmem:[#allocation3 + $0x230] sm:$0xff]
    %v121 = vld [vmem:[#allocation3 + $0x238] sm:$0xff]
    %v122 = vld [vmem:[#allocation3 + $0x240] sm:$0xff]
    %v123 = vld [vmem:[#allocation3 + $0x248] sm:$0xff]
    %v124 = vld [vmem:[#allocation3 + $0x250] sm:$0xff]
    %v125 = vld [vmem:[#allocation3 + $0x258] sm:$0xff]
    %v126 = vld [vmem:[#allocation3 + $0x260] sm:$0xff]
    %v127 = vld [vmem:[#allocation3 + $0x268] sm:$0xff]
    %v128 = vld [vmem:[#allocation3 + $0x270] sm:$0xff]
    %v129 = vld [vmem:[#allocation3 + $0x278] sm:$0xff]
    %v130 = vld [vmem:[#allocation3 + $0x280] sm:$0xff]
    %v131 = vld [vmem:[#allocation3 + $0x288] sm:$0xff]
    %v132 = vld [vmem:[#allocation3 + $0x290] sm:$0xff]
    %v133 = vld [vmem:[#allocation3 + $0x298] sm:$0xff]
    %v134 = vld [vmem:[#allocation3 + $0x2a0] sm:$0xff]
    %v135 = vld [vmem:[#allocation3 + $0x2a8] sm:$0xff]
    %v136 = vld [vmem:[#allocation3 + $0x2b0] sm:$0xff]
    %v137 = vld [vmem:[#allocation3 + $0x2b8] sm:$0xff]
    %v138 = vld [vmem:[#allocation3 + $0x2c0] sm:$0xff]
    %v139 = vld [vmem:[#allocation3 + $0x2c8] sm:$0xff]
    %v140 = vld [vmem:[#allocation3 + $0x2d0] sm:$0xff]
    %v141 = vld [vmem:[#allocation3 + $0x2d8] sm:$0xff]
    %v142 = vld [vmem:[#allocation3 + $0x2e0] sm:$0xff]
    %v143 = vld [vmem:[#allocation3 + $0x2e8] sm:$0xff]
    %v144 = vld [vmem:[#allocation3 + $0x2f0] sm:$0xff]
    %v145 = vld [vmem:[#allocation3 + $0x2f8] sm:$0xff]
    %v146 = vld [vmem:[#allocation3 + $0x300] sm:$0xff]
    %v147 = vld [vmem:[#allocation3 + $0x308] sm:$0xff]
    %v148 = vld [vmem:[#allocation3 + $0x310] sm:$0xff]
    %v149 = vld [vmem:[#allocation3 + $0x318] sm:$0xff]
    %v150 = vld [vmem:[#allocation3 + $0x320] sm:$0xff]
    %v151 = vld [vmem:[#allocation3 + $0x328] sm:$0xff]
    %v152 = vld [vmem:[#allocation3 + $0x330] sm:$0xff]
    %v153 = vld [vmem:[#allocation3 + $0x338] sm:$0xff]
    %v154 = vld [vmem:[#allocation3 + $0x340] sm:$0xff]
    %v155 = vld [vmem:[#allocation3 + $0x348] sm:$0xff]
    %v156 = vld [vmem:[#allocation3 + $0x350] sm:$0xff]
    %v157 = vld [vmem:[#allocation3 + $0x358] sm:$0xff]
    %v158 = vld [vmem:[#allocation3 + $0x360] sm:$0xff]
    %v159 = vld [vmem:[#allocation3 + $0x368] sm:$0xff]
    %v160 = vld [vmem:[#allocation3 + $0x370] sm:$0xff]
    %v161 = vld [vmem:[#allocation3 + $0x378] sm:$0xff]
    %v162 = vld [vmem:[#allocation3 + $0x380] sm:$0xff]
    %v163 = vld [vmem:[#allocation3 + $0x388] sm:$0xff]
    %v164 = vld [vmem:[#allocation3 + $0x390] sm:$0xff]
    %v165 = vld [vmem:[#allocation3 + $0x398] sm:$0xff]
    %v166 = vld [vmem:[#allocation3 + $0x3a0] sm:$0xff]
    %v167 = vld [vmem:[#allocation3 + $0x3a8] sm:$0xff]
    %v168 = vld [vmem:[#allocation3 + $0x3b0] sm:$0xff]
    %v169 = vld [vmem:[#allocation3 + $0x3b8] sm:$0xff]
    %v170 = vld [vmem:[#allocation3 + $0x3c0] sm:$0xff]
    %v171 = vld [vmem:[#allocation3 + $0x3c8] sm:$0xff]
    %v172 = vld [vmem:[#allocation3 + $0x3d0] sm:$0xff]
    %v173 = vld [vmem:[#allocation3 + $0x3d8] sm:$0xff]
    %v174 = vld [vmem:[#allocation3 + $0x3e0] sm:$0xff]
    %v175 = vld [vmem:[#allocation3 + $0x3e8] sm:$0xff]
    %v176 = vld [vmem:[#allocation3 + $0x3f0] sm:$0xff]
    %v177 = vld [vmem:[#allocation3 + $0x3f8] sm:$0xff]
    %v178 = vld [vmem:[#allocation3 + $0x400] sm:$0xff]
    %v179 = vld [vmem:[#allocation3 + $0x408] sm:$0xff]
    %v180 = vld [vmem:[#allocation3 + $0x410] sm:$0xff]
    %v181 = vld [vmem:[#allocation3 + $0x418] sm:$0xff]
    %v182 = vld [vmem:[#allocation3 + $0x420] sm:$0xff]
    %v183 = vld [vmem:[#allocation3 + $0x428] sm:$0xff]
    %v184 = vld [vmem:[#allocation3 + $0x430] sm:$0xff]
    %v185 = vld [vmem:[#allocation3 + $0x438] sm:$0xff]
    %v186 = vld [vmem:[#allocation3 + $0x440] sm:$0xff]
    %v187 = vld [vmem:[#allocation3 + $0x448] sm:$0xff]
    %v188 = vld [vmem:[#allocation3 + $0x450] sm:$0xff]
    %v189 = vld [vmem:[#allocation3 + $0x458] sm:$0xff]
    %v190 = vld [vmem:[#allocation3 + $0x460] sm:$0xff]
    %v191 = vld [vmem:[#allocation3 + $0x468] sm:$0xff]
    %v192 = vld [vmem:[#allocation3 + $0x470] sm:$0xff]
    %v193 = vld [vmem:[#allocation3 + $0x478] sm:$0xff]
    %v194 = vld [vmem:[#allocation3 + $0x480] sm:$0xff]
    %v195 = vld [vmem:[#allocation3 + $0x488] sm:$0xff]
    %v196 = vld [vmem:[#allocation3 + $0x490] sm:$0xff]
    %v197 = vld [vmem:[#allocation3 + $0x498] sm:$0xff]
    %v198 = vld [vmem:[#allocation3 + $0x4a0] sm:$0xff]
    %v199 = vld [vmem:[#allocation3 + $0x4a8] sm:$0xff]
    %v200 = vld [vmem:[#allocation3 + $0x4b0] sm:$0xff]
    %v201 = vld [vmem:[#allocation3 + $0x4b8] sm:$0xff]
    %v202 = vld [vmem:[#allocation3 + $0x4c0] sm:$0xff]
    %v203 = vld [vmem:[#allocation3 + $0x4c8] sm:$0xff]
    %v204 = vld [vmem:[#allocation3 + $0x4d0] sm:$0xff]
    %v205 = vld [vmem:[#allocation3 + $0x4d8] sm:$0xff]
    %v206 = vld [vmem:[#allocation3 + $0x4e0] sm:$0xff]
    %v207 = vld [vmem:[#allocation3 + $0x4e8] sm:$0xff]
    %v208 = vld [vmem:[#allocation3 + $0x4f0] sm:$0xff]
    %v209 = vld [vmem:[#allocation3 + $0x4f8] sm:$0xff]
    %v210 = vld [vmem:[#allocation3 + $0x500] sm:$0xff]
    %v211 = vld [vmem:[#allocation3 + $0x508] sm:$0xff]
    %v212 = vld [vmem:[#allocation3 + $0x510] sm:$0xff]
    %v213 = vld [vmem:[#allocation3 + $0x518] sm:$0xff]
    %v214 = vld [vmem:[#allocation3 + $0x520] sm:$0xff]
    %v215 = vld [vmem:[#allocation3 + $0x528] sm:$0xff]
    %v216 = vld [vmem:[#allocation3 + $0x530] sm:$0xff]
    %v217 = vld [vmem:[#allocation3 + $0x538] sm:$0xff]
    %v218 = vld [vmem:[#allocation3 + $0x540] sm:$0xff]
    %v219 = vld [vmem:[#allocation3 + $0x548] sm:$0xff]
    %v220 = vld [vmem:[#allocation3 + $0x550] sm:$0xff]
    %v221 = vld [vmem:[#allocation3 + $0x558] sm:$0xff]
    %v222 = vld [vmem:[#allocation3 + $0x560] sm:$0xff]
    %v223 = vld [vmem:[#allocation3 + $0x568] sm:$0xff]
    %v224 = vld [vmem:[#allocation3 + $0x570] sm:$0xff]
    %v225 = vld [vmem:[#allocation3 + $0x578] sm:$0xff]
    %v226 = vld [vmem:[#allocation3 + $0x580] sm:$0xff]
    %v227 = vld [vmem:[#allocation3 + $0x588] sm:$0xff]
    %v228 = vld [vmem:[#allocation3 + $0x590] sm:$0xff]
    %v229 = vld [vmem:[#allocation3 + $0x598] sm:$0xff]
    %v230 = vld [vmem:[#allocation3 + $0x5a0] sm:$0xff]
    %v231 = vld [vmem:[#allocation3 + $0x5a8] sm:$0xff]
    %v232 = vld [vmem:[#allocation3 + $0x5b0] sm:$0xff]
    %v233 = vld [vmem:[#allocation3 + $0x5b8] sm:$0xff]
    %v234 = vld [vmem:[#allocation3 + $0x5c0] sm:$0xff]
    %v235 = vld [vmem:[#allocation3 + $0x5c8] sm:$0xff]
    %v236 = vld [vmem:[#allocation3 + $0x5d0] sm:$0xff]
    %v237 = vld [vmem:[#allocation3 + $0x5d8] sm:$0xff]
    %v238 = vld [vmem:[#allocation3 + $0x5e0] sm:$0xff]
    %v239 = vld [vmem:[#allocation3 + $0x5e8] sm:$0xff]
    %v240 = vld [vmem:[#allocation3 + $0x5f0] sm:$0xff]
    %v241 = vld [vmem:[#allocation3 + $0x5f8] sm:$0xff]
    %v242 = vld [vmem:[#allocation3 + $0x600] sm:$0xff]
    %v243 = vld [vmem:[#allocation3 + $0x608] sm:$0xff]
    %v244 = vld [vmem:[#allocation3 + $0x610] sm:$0xff]
    %v245 = vld [vmem:[#allocation3 + $0x618] sm:$0xff]
    %v246 = vld [vmem:[#allocation3 + $0x620] sm:$0xff]
    %v247 = vld [vmem:[#allocation3 + $0x628] sm:$0xff]
    %v248 = vld [vmem:[#allocation3 + $0x630] sm:$0xff]
    %v249 = vld [vmem:[#allocation3 + $0x638] sm:$0xff]
    %v250 = vld [vmem:[#allocation3 + $0x640] sm:$0xff]
    %v251 = vld [vmem:[#allocation3 + $0x648] sm:$0xff]
    %v252 = vld [vmem:[#allocation3 + $0x650] sm:$0xff]
    %v253 = vld [vmem:[#allocation3 + $0x658] sm:$0xff]
    %v254 = vld [vmem:[#allocation3 + $0x660] sm:$0xff]
    %v255 = vld [vmem:[#allocation3 + $0x668] sm:$0xff]
    %v256 = vld [vmem:[#allocation3 + $0x670] sm:$0xff]
    %v257 = vld [vmem:[#allocation3 + $0x678] sm:$0xff]
    %v258 = vld [vmem:[#allocation3 + $0x680] sm:$0xff]
    %v259 = vld [vmem:[#allocation3 + $0x688] sm:$0xff]
    %v260 = vld [vmem:[#allocation3 + $0x690] sm:$0xff]
    %v261 = vld [vmem:[#allocation3 + $0x698] sm:$0xff]
    %v262 = vld [vmem:[#allocation3 + $0x6a0] sm:$0xff]
    %v263 = vld [vmem:[#allocation3 + $0x6a8] sm:$0xff]
    %v264 = vld [vmem:[#allocation3 + $0x6b0] sm:$0xff]
    %v265 = vld [vmem:[#allocation3 + $0x6b8] sm:$0xff]
    %v266 = vld [vmem:[#allocation3 + $0x6c0] sm:$0xff]
    %v267 = vld [vmem:[#allocation3 + $0x6c8] sm:$0xff]
    %v268 = vld [vmem:[#allocation3 + $0x6d0] sm:$0xff]
    %v269 = vld [vmem:[#allocation3 + $0x6d8] sm:$0xff]
    %v270 = vld [vmem:[#allocation3 + $0x6e0] sm:$0xff]
    %v271 = vld [vmem:[#allocation3 + $0x6e8] sm:$0xff]
    %v272 = vld [vmem:[#allocation3 + $0x6f0] sm:$0xff]
    %v273 = vld [vmem:[#allocation3 + $0x6f8] sm:$0xff]
    %v274 = vld [vmem:[#allocation3 + $0x700] sm:$0xff]
    %v275 = vld [vmem:[#allocation3 + $0x708] sm:$0xff]
    %v276 = vld [vmem:[#allocation3 + $0x710] sm:$0xff]
    %v277 = vld [vmem:[#allocation3 + $0x718] sm:$0xff]
    %v278 = vld [vmem:[#allocation3 + $0x720] sm:$0xff]
    %v279 = vld [vmem:[#allocation3 + $0x728] sm:$0xff]
    %v280 = vld [vmem:[#allocation3 + $0x730] sm:$0xff]
    %v281 = vld [vmem:[#allocation3 + $0x738] sm:$0xff]
    %v282 = vld [vmem:[#allocation3 + $0x740] sm:$0xff]
    %v283 = vld [vmem:[#allocation3 + $0x748] sm:$0xff]
    %v284 = vld [vmem:[#allocation3 + $0x750] sm:$0xff]
    %v285 = vld [vmem:[#allocation3 + $0x758] sm:$0xff]
    %v286 = vld [vmem:[#allocation3 + $0x760] sm:$0xff]
    %v287 = vld [vmem:[#allocation3 + $0x768] sm:$0xff]
    %v288 = vld [vmem:[#allocation3 + $0x770] sm:$0xff]
    %v289 = vld [vmem:[#allocation3 + $0x778] sm:$0xff]
    %v290 = vld [vmem:[#allocation3 + $0x780] sm:$0xff]
    %v291 = vld [vmem:[#allocation3 + $0x788] sm:$0xff]
    %v292 = vld [vmem:[#allocation3 + $0x790] sm:$0xff]
    %v293 = vld [vmem:[#allocation3 + $0x798] sm:$0xff]
    %v294 = vld [vmem:[#allocation3 + $0x7a0] sm:$0xff]
    %v295 = vld [vmem:[#allocation3 + $0x7a8] sm:$0xff]
    %v296 = vld [vmem:[#allocation3 + $0x7b0] sm:$0xff]
    %v297 = vld [vmem:[#allocation3 + $0x7b8] sm:$0xff]
    %v298 = vld [vmem:[#allocation3 + $0x7c0] sm:$0xff]
    %v299 = vld [vmem:[#allocation3 + $0x7c8] sm:$0xff]
    %v300 = vld [vmem:[#allocation3 + $0x7d0] sm:$0xff]
    %v301 = vld [vmem:[#allocation3 + $0x7d8] sm:$0xff]
    %v302 = vld [vmem:[#allocation3 + $0x7e0] sm:$0xff]
    %v303 = vld [vmem:[#allocation3 + $0x7e8] sm:$0xff]
    %v304 = vld [vmem:[#allocation3 + $0x7f0] sm:$0xff]
    %v305 = vld [vmem:[#allocation3 + $0x7f8] sm:$0xff]
    %s306 = sadd.s32 0, 0
    %s307 = smul.u32 %s306, 128
    %v308 = vlaneseq
    %v309 = vshrl.u32 %v308, 7
    %v310 = vadd.s32 %v309, 8
    %v311 = vadd.s32 %v309, 16
    %v312 = vadd.s32 %v309, 24
    %v313 = vadd.s32 %v309, 32
    %v314 = vadd.s32 %v309, 40
    %v315 = vadd.s32 %v309, 48
    %v316 = vadd.s32 %v309, 56
    %v317 = vadd.s32 %v309, 64
    %v318 = vadd.s32 %v309, 72
    %v319 = vadd.s32 %v309, 80
    %v320 = vadd.s32 %v309, 88
    %v321 = vadd.s32 %v309, 96
    %v322 = vadd.s32 %v309, 104
    %v323 = vadd.s32 %v309, 112
    %v324 = vadd.s32 %v309, 120
    %v325 = vstv %s307
    %v326 = vadd.s32 %v309, %v325
    %v327 = vadd.s32 %v310, %v325
    %v328 = vadd.s32 %v311, %v325
    %v329 = vadd.s32 %v312, %v325
    %v330 = vadd.s32 %v313, %v325
    %v331 = vadd.s32 %v314, %v325
    %v332 = vadd.s32 %v315, %v325
    %v333 = vadd.s32 %v316, %v325
    %v334 = vadd.s32 %v317, %v325
    %v335 = vadd.s32 %v318, %v325
    %v336 = vadd.s32 %v319, %v325
    %v337 = vadd.s32 %v320, %v325
    %v338 = vadd.s32 %v321, %v325
    %v339 = vadd.s32 %v322, %v325
    %v340 = vadd.s32 %v323, %v325
    %v341 = vadd.s32 %v324, %v325
    %vm342 = vcmp.lt.s32.totalorder %v326, 128
    %vm343 = vcmp.lt.s32.totalorder %v327, 128
    %vm344 = vcmp.lt.s32.totalorder %v328, 128
    %vm345 = vcmp.lt.s32.totalorder %v329, 128
    %vm346 = vcmp.lt.s32.totalorder %v330, 128
    %vm347 = vcmp.lt.s32.totalorder %v331, 128
    %vm348 = vcmp.lt.s32.totalorder %v332, 128
    %vm349 = vcmp.lt.s32.totalorder %v333, 128
    %vm350 = vcmp.lt.s32.totalorder %v334, 128
    %vm351 = vcmp.lt.s32.totalorder %v335, 128
    %vm352 = vcmp.lt.s32.totalorder %v336, 128
    %vm353 = vcmp.lt.s32.totalorder %v337, 128
    %vm354 = vcmp.lt.s32.totalorder %v338, 128
    %vm355 = vcmp.lt.s32.totalorder %v339, 128
    %vm356 = vcmp.lt.s32.totalorder %v340, 128
    %vm357 = vcmp.lt.s32.totalorder %v341, 128
    %v358 = vsel %vm342, 1, 0
    %v359 = vsel %vm343, 1, 0
    %v360 = vsel %vm344, 1, 0
    %v361 = vsel %vm345, 1, 0
    %v362 = vsel %vm346, 1, 0
    %v363 = vsel %vm347, 1, 0
    %v364 = vsel %vm348, 1, 0
    %v365 = vsel %vm349, 1, 0
    %v366 = vsel %vm350, 1, 0
    %v367 = vsel %vm351, 1, 0
    %v368 = vsel %vm352, 1, 0
    %v369 = vsel %vm353, 1, 0
    %v370 = vsel %vm354, 1, 0
    %v371 = vsel %vm355, 1, 0
    %v372 = vsel %vm356, 1, 0
    %v373 = vsel %vm357, 1, 0
    %vm374 = vcmp.eq.s32.totalorder %v358, 1
    %vm375 = vcmp.eq.s32.totalorder %v359, 1
    %vm376 = vcmp.eq.s32.totalorder %v360, 1
    %vm377 = vcmp.eq.s32.totalorder %v361, 1
    %vm378 = vcmp.eq.s32.totalorder %v362, 1
    %vm379 = vcmp.eq.s32.totalorder %v363, 1
    %vm380 = vcmp.eq.s32.totalorder %v364, 1
    %vm381 = vcmp.eq.s32.totalorder %v365, 1
    %vm382 = vcmp.eq.s32.totalorder %v366, 1
    %vm383 = vcmp.eq.s32.totalorder %v367, 1
    %vm384 = vcmp.eq.s32.totalorder %v368, 1
    %vm385 = vcmp.eq.s32.totalorder %v369, 1
    %vm386 = vcmp.eq.s32.totalorder %v370, 1
    %vm387 = vcmp.eq.s32.totalorder %v371, 1
    %vm388 = vcmp.eq.s32.totalorder %v372, 1
    %vm389 = vcmp.eq.s32.totalorder %v373, 1
    %v390 = vsel %vm374, %v50, 0.0
    %v391 = vsel %vm374, %v51, 0.0
    %v392 = vsel %vm374, %v52, 0.0
    %v393 = vsel %vm374, %v53, 0.0
    %v394 = vsel %vm374, %v54, 0.0
    %v395 = vsel %vm374, %v55, 0.0
    %v396 = vsel %vm374, %v56, 0.0
    %v397 = vsel %vm374, %v57, 0.0
    %v398 = vsel %vm374, %v58, 0.0
    %v399 = vsel %vm374, %v59, 0.0
    %v400 = vsel %vm374, %v60, 0.0
    %v401 = vsel %vm374, %v61, 0.0
    %v402 = vsel %vm374, %v62, 0.0
    %v403 = vsel %vm374, %v63, 0.0
    %v404 = vsel %vm374, %v64, 0.0
    %v405 = vsel %vm374, %v65, 0.0
    %v406 = vsel %vm375, %v66, 0.0
    %v407 = vsel %vm375, %v67, 0.0
    %v408 = vsel %vm375, %v68, 0.0
    %v409 = vsel %vm375, %v69, 0.0
    %v410 = vsel %vm375, %v70, 0.0
    %v411 = vsel %vm375, %v71, 0.0
    %v412 = vsel %vm375, %v72, 0.0
    %v413 = vsel %vm375, %v73, 0.0
    %v414 = vsel %vm375, %v74, 0.0
    %v415 = vsel %vm375, %v75, 0.0
    %v416 = vsel %vm375, %v76, 0.0
    %v417 = vsel %vm375, %v77, 0.0
    %v418 = vsel %vm375, %v78, 0.0
    %v419 = vsel %vm375, %v79, 0.0
    %v420 = vsel %vm375, %v80, 0.0
    %v421 = vsel %vm375, %v81, 0.0
    %v422 = vsel %vm376, %v82, 0.0
    %v423 = vsel %vm376, %v83, 0.0
    %v424 = vsel %vm376, %v84, 0.0
    %v425 = vsel %vm376, %v85, 0.0
    %v426 = vsel %vm376, %v86, 0.0
    %v427 = vsel %vm376, %v87, 0.0
    %v428 = vsel %vm376, %v88, 0.0
    %v429 = vsel %vm376, %v89, 0.0
    %v430 = vsel %vm376, %v90, 0.0
    %v431 = vsel %vm376, %v91, 0.0
    %v432 = vsel %vm376, %v92, 0.0
    %v433 = vsel %vm376, %v93, 0.0
    %v434 = vsel %vm376, %v94, 0.0
    %v435 = vsel %vm376, %v95, 0.0
    %v436 = vsel %vm376, %v96, 0.0
    %v437 = vsel %vm376, %v97, 0.0
    %v438 = vsel %vm377, %v98, 0.0
    %v439 = vsel %vm377, %v99, 0.0
    %v440 = vsel %vm377, %v100, 0.0
    %v441 = vsel %vm377, %v101, 0.0
    %v442 = vsel %vm377, %v102, 0.0
    %v443 = vsel %vm377, %v103, 0.0
    %v444 = vsel %vm377, %v104, 0.0
    %v445 = vsel %vm377, %v105, 0.0
    %v446 = vsel %vm377, %v106, 0.0
    %v447 = vsel %vm377, %v107, 0.0
    %v448 = vsel %vm377, %v108, 0.0
    %v449 = vsel %vm377, %v109, 0.0
    %v450 = vsel %vm377, %v110, 0.0
    %v451 = vsel %vm377, %v111, 0.0
    %v452 = vsel %vm377, %v112, 0.0
    %v453 = vsel %vm377, %v113, 0.0
    %v454 = vsel %vm378, %v114, 0.0
    %v455 = vsel %vm378, %v115, 0.0
    %v456 = vsel %vm378, %v116, 0.0
    %v457 = vsel %vm378, %v117, 0.0
    %v458 = vsel %vm378, %v118, 0.0
    %v459 = vsel %vm378, %v119, 0.0
    %v460 = vsel %vm378, %v120, 0.0
    %v461 = vsel %vm378, %v121, 0.0
    %v462 = vsel %vm378, %v122, 0.0
    %v463 = vsel %vm378, %v123, 0.0
    %v464 = vsel %vm378, %v124, 0.0
    %v465 = vsel %vm378, %v125, 0.0
    %v466 = vsel %vm378, %v126, 0.0
    %v467 = vsel %vm378, %v127, 0.0
    %v468 = vsel %vm378, %v128, 0.0
    %v469 = vsel %vm378, %v129, 0.0
    %v470 = vsel %vm379, %v130, 0.0
    %v471 = vsel %vm379, %v131, 0.0
    %v472 = vsel %vm379, %v132, 0.0
    %v473 = vsel %vm379, %v133, 0.0
    %v474 = vsel %vm379, %v134, 0.0
    %v475 = vsel %vm379, %v135, 0.0
    %v476 = vsel %vm379, %v136, 0.0
    %v477 = vsel %vm379, %v137, 0.0
    %v478 = vsel %vm379, %v138, 0.0
    %v479 = vsel %vm379, %v139, 0.0
    %v480 = vsel %vm379, %v140, 0.0
    %v481 = vsel %vm379, %v141, 0.0
    %v482 = vsel %vm379, %v142, 0.0
    %v483 = vsel %vm379, %v143, 0.0
    %v484 = vsel %vm379, %v144, 0.0
    %v485 = vsel %vm379, %v145, 0.0
    %v486 = vsel %vm380, %v146, 0.0
    %v487 = vsel %vm380, %v147, 0.0
    %v488 = vsel %vm380, %v148, 0.0
    %v489 = vsel %vm380, %v149, 0.0
    %v490 = vsel %vm380, %v150, 0.0
    %v491 = vsel %vm380, %v151, 0.0
    %v492 = vsel %vm380, %v152, 0.0
    %v493 = vsel %vm380, %v153, 0.0
    %v494 = vsel %vm380, %v154, 0.0
    %v495 = vsel %vm380, %v155, 0.0
    %v496 = vsel %vm380, %v156, 0.0
    %v497 = vsel %vm380, %v157, 0.0
    %v498 = vsel %vm380, %v158, 0.0
    %v499 = vsel %vm380, %v159, 0.0
    %v500 = vsel %vm380, %v160, 0.0
    %v501 = vsel %vm380, %v161, 0.0
    %v502 = vsel %vm381, %v162, 0.0
    %v503 = vsel %vm381, %v163, 0.0
    %v504 = vsel %vm381, %v164, 0.0
    %v505 = vsel %vm381, %v165, 0.0
    %v506 = vsel %vm381, %v166, 0.0
    %v507 = vsel %vm381, %v167, 0.0
    %v508 = vsel %vm381, %v168, 0.0
    %v509 = vsel %vm381, %v169, 0.0
    %v510 = vsel %vm381, %v170, 0.0
    %v511 = vsel %vm381, %v171, 0.0
    %v512 = vsel %vm381, %v172, 0.0
    %v513 = vsel %vm381, %v173, 0.0
    %v514 = vsel %vm381, %v174, 0.0
    %v515 = vsel %vm381, %v175, 0.0
    %v516 = vsel %vm381, %v176, 0.0
    %v517 = vsel %vm381, %v177, 0.0
    %v518 = vsel %vm382, %v178, 0.0
    %v519 = vsel %vm382, %v179, 0.0
    %v520 = vsel %vm382, %v180, 0.0
    %v521 = vsel %vm382, %v181, 0.0
    %v522 = vsel %vm382, %v182, 0.0
    %v523 = vsel %vm382, %v183, 0.0
    %v524 = vsel %vm382, %v184, 0.0
    %v525 = vsel %vm382, %v185, 0.0
    %v526 = vsel %vm382, %v186, 0.0
    %v527 = vsel %vm382, %v187, 0.0
    %v528 = vsel %vm382, %v188, 0.0
    %v529 = vsel %vm382, %v189, 0.0
    %v530 = vsel %vm382, %v190, 0.0
    %v531 = vsel %vm382, %v191, 0.0
    %v532 = vsel %vm382, %v192, 0.0
    %v533 = vsel %vm382, %v193, 0.0
    %v534 = vsel %vm383, %v194, 0.0
    %v535 = vsel %vm383, %v195, 0.0
    %v536 = vsel %vm383, %v196, 0.0
    %v537 = vsel %vm383, %v197, 0.0
    %v538 = vsel %vm383, %v198, 0.0
    %v539 = vsel %vm383, %v199, 0.0
    %v540 = vsel %vm383, %v200, 0.0
    %v541 = vsel %vm383, %v201, 0.0
    %v542 = vsel %vm383, %v202, 0.0
    %v543 = vsel %vm383, %v203, 0.0
    %v544 = vsel %vm383, %v204, 0.0
    %v545 = vsel %vm383, %v205, 0.0
    %v546 = vsel %vm383, %v206, 0.0
    %v547 = vsel %vm383, %v207, 0.0
    %v548 = vsel %vm383, %v208, 0.0
    %v549 = vsel %vm383, %v209, 0.0
    %v550 = vsel %vm384, %v210, 0.0
    %v551 = vsel %vm384, %v211, 0.0
    %v552 = vsel %vm384, %v212, 0.0
    %v553 = vsel %vm384, %v213, 0.0
    %v554 = vsel %vm384, %v214, 0.0
    %v555 = vsel %vm384, %v215, 0.0
    %v556 = vsel %vm384, %v216, 0.0
    %v557 = vsel %vm384, %v217, 0.0
    %v558 = vsel %vm384, %v218, 0.0
    %v559 = vsel %vm384, %v219, 0.0
    %v560 = vsel %vm384, %v220, 0.0
    %v561 = vsel %vm384, %v221, 0.0
    %v562 = vsel %vm384, %v222, 0.0
    %v563 = vsel %vm384, %v223, 0.0
    %v564 = vsel %vm384, %v224, 0.0
    %v565 = vsel %vm384, %v225, 0.0
    %v566 = vsel %vm385, %v226, 0.0
    %v567 = vsel %vm385, %v227, 0.0
    %v568 = vsel %vm385, %v228, 0.0
    %v569 = vsel %vm385, %v229, 0.0
    %v570 = vsel %vm385, %v230, 0.0
    %v571 = vsel %vm385, %v231, 0.0
    %v572 = vsel %vm385, %v232, 0.0
    %v573 = vsel %vm385, %v233, 0.0
    %v574 = vsel %vm385, %v234, 0.0
    %v575 = vsel %vm385, %v235, 0.0
    %v576 = vsel %vm385, %v236, 0.0
    %v577 = vsel %vm385, %v237, 0.0
    %v578 = vsel %vm385, %v238, 0.0
    %v579 = vsel %vm385, %v239, 0.0
    %v580 = vsel %vm385, %v240, 0.0
    %v581 = vsel %vm385, %v241, 0.0
    %v582 = vsel %vm386, %v242, 0.0
    %v583 = vsel %vm386, %v243, 0.0
    %v584 = vsel %vm386, %v244, 0.0
    %v585 = vsel %vm386, %v245, 0.0
    %v586 = vsel %vm386, %v246, 0.0
    %v587 = vsel %vm386, %v247, 0.0
    %v588 = vsel %vm386, %v248, 0.0
    %v589 = vsel %vm386, %v249, 0.0
    %v590 = vsel %vm386, %v250, 0.0
    %v591 = vsel %vm386, %v251, 0.0
    %v592 = vsel %vm386, %v252, 0.0
    %v593 = vsel %vm386, %v253, 0.0
    %v594 = vsel %vm386, %v254, 0.0
    %v595 = vsel %vm386, %v255, 0.0
    %v596 = vsel %vm386, %v256, 0.0
    %v597 = vsel %vm386, %v257, 0.0
    %v598 = vsel %vm387, %v258, 0.0
    %v599 = vsel %vm387, %v259, 0.0
    %v600 = vsel %vm387, %v260, 0.0
    %v601 = vsel %vm387, %v261, 0.0
    %v602 = vsel %vm387, %v262, 0.0
    %v603 = vsel %vm387, %v263, 0.0
    %v604 = vsel %vm387, %v264, 0.0
    %v605 = vsel %vm387, %v265, 0.0
    %v606 = vsel %vm387, %v266, 0.0
    %v607 = vsel %vm387, %v267, 0.0
    %v608 = vsel %vm387, %v268, 0.0
    %v609 = vsel %vm387, %v269, 0.0
    %v610 = vsel %vm387, %v270, 0.0
    %v611 = vsel %vm387, %v271, 0.0
    %v612 = vsel %vm387, %v272, 0.0
    %v613 = vsel %vm387, %v273, 0.0
    %v614 = vsel %vm388, %v274, 0.0
    %v615 = vsel %vm388, %v275, 0.0
    %v616 = vsel %vm388, %v276, 0.0
    %v617 = vsel %vm388, %v277, 0.0
    %v618 = vsel %vm388, %v278, 0.0
    %v619 = vsel %vm388, %v279, 0.0
    %v620 = vsel %vm388, %v280, 0.0
    %v621 = vsel %vm388, %v281, 0.0
    %v622 = vsel %vm388, %v282, 0.0
    %v623 = vsel %vm388, %v283, 0.0
    %v624 = vsel %vm388, %v284, 0.0
    %v625 = vsel %vm388, %v285, 0.0
    %v626 = vsel %vm388, %v286, 0.0
    %v627 = vsel %vm388, %v287, 0.0
    %v628 = vsel %vm388, %v288, 0.0
    %v629 = vsel %vm388, %v289, 0.0
    %v630 = vsel %vm389, %v290, 0.0
    %v631 = vsel %vm389, %v291, 0.0
    %v632 = vsel %vm389, %v292, 0.0
    %v633 = vsel %vm389, %v293, 0.0
    %v634 = vsel %vm389, %v294, 0.0
    %v635 = vsel %vm389, %v295, 0.0
    %v636 = vsel %vm389, %v296, 0.0
    %v637 = vsel %vm389, %v297, 0.0
    %v638 = vsel %vm389, %v298, 0.0
    %v639 = vsel %vm389, %v299, 0.0
    %v640 = vsel %vm389, %v300, 0.0
    %v641 = vsel %vm389, %v301, 0.0
    %v642 = vsel %vm389, %v302, 0.0
    %v643 = vsel %vm389, %v303, 0.0
    %v644 = vsel %vm389, %v304, 0.0
    %v645 = vsel %vm389, %v305, 0.0
    %v646 = vld [vmem:[#allocation2] sm:$0xff]
    %v647 = vld [vmem:[#allocation2 + $0x8] sm:$0xff]
    %v648 = vld [vmem:[#allocation2 + $0x10] sm:$0xff]
    %v649 = vld [vmem:[#allocation2 + $0x18] sm:$0xff]
    %v650 = vld [vmem:[#allocation2 + $0x20] sm:$0xff]
    %v651 = vld [vmem:[#allocation2 + $0x28] sm:$0xff]
    %v652 = vld [vmem:[#allocation2 + $0x30] sm:$0xff]
    %v653 = vld [vmem:[#allocation2 + $0x38] sm:$0xff]
    %v654 = vld [vmem:[#allocation2 + $0x40] sm:$0xff]
    %v655 = vld [vmem:[#allocation2 + $0x48] sm:$0xff]
    %v656 = vld [vmem:[#allocation2 + $0x50] sm:$0xff]
    %v657 = vld [vmem:[#allocation2 + $0x58] sm:$0xff]
    %v658 = vld [vmem:[#allocation2 + $0x60] sm:$0xff]
    %v659 = vld [vmem:[#allocation2 + $0x68] sm:$0xff]
    %v660 = vld [vmem:[#allocation2 + $0x70] sm:$0xff]
    %v661 = vld [vmem:[#allocation2 + $0x78] sm:$0xff]
    %v662 = vadd.f32 %v390, %v406
    %v663 = vadd.f32 %v662, %v422
    %v664 = vadd.f32 %v663, %v438
    %v665 = vadd.f32 %v664, %v454
    %v666 = vadd.f32 %v665, %v470
    %v667 = vadd.f32 %v666, %v486
    %v668 = vadd.f32 %v667, %v502
    %v669 = vadd.f32 %v668, %v518
    %v670 = vadd.f32 %v669, %v534
    %v671 = vadd.f32 %v670, %v550
    %v672 = vadd.f32 %v671, %v566
    %v673 = vadd.f32 %v672, %v582
    %v674 = vadd.f32 %v673, %v598
    %v675 = vadd.f32 %v674, %v614
    %v676 = vadd.f32 %v675, %v630
    %v677 = vadd.f32 %v391, %v407
    %v678 = vadd.f32 %v677, %v423
    %v679 = vadd.f32 %v678, %v439
    %v680 = vadd.f32 %v679, %v455
    %v681 = vadd.f32 %v680, %v471
    %v682 = vadd.f32 %v681, %v487
    %v683 = vadd.f32 %v682, %v503
    %v684 = vadd.f32 %v683, %v519
    %v685 = vadd.f32 %v684, %v535
    %v686 = vadd.f32 %v685, %v551
    %v687 = vadd.f32 %v686, %v567
    %v688 = vadd.f32 %v687, %v583
    %v689 = vadd.f32 %v688, %v599
    %v690 = vadd.f32 %v689, %v615
    %v691 = vadd.f32 %v690, %v631
    %v692 = vadd.f32 %v392, %v408
    %v693 = vadd.f32 %v692, %v424
    %v694 = vadd.f32 %v693, %v440
    %v695 = vadd.f32 %v694, %v456
    %v696 = vadd.f32 %v695, %v472
    %v697 = vadd.f32 %v696, %v488
    %v698 = vadd.f32 %v697, %v504
    %v699 = vadd.f32 %v698, %v520
    %v700 = vadd.f32 %v699, %v536
    %v701 = vadd.f32 %v700, %v552
    %v702 = vadd.f32 %v701, %v568
    %v703 = vadd.f32 %v702, %v584
    %v704 = vadd.f32 %v703, %v600
    %v705 = vadd.f32 %v704, %v616
    %v706 = vadd.f32 %v705, %v632
    %v707 = vadd.f32 %v393, %v409
    %v708 = vadd.f32 %v707, %v425
    %v709 = vadd.f32 %v708, %v441
    %v710 = vadd.f32 %v709, %v457
    %v711 = vadd.f32 %v710, %v473
    %v712 = vadd.f32 %v711, %v489
    %v713 = vadd.f32 %v712, %v505
    %v714 = vadd.f32 %v713, %v521
    %v715 = vadd.f32 %v714, %v537
    %v716 = vadd.f32 %v715, %v553
    %v717 = vadd.f32 %v716, %v569
    %v718 = vadd.f32 %v717, %v585
    %v719 = vadd.f32 %v718, %v601
    %v720 = vadd.f32 %v719, %v617
    %v721 = vadd.f32 %v720, %v633
    %v722 = vadd.f32 %v394, %v410
    %v723 = vadd.f32 %v722, %v426
    %v724 = vadd.f32 %v723, %v442
    %v725 = vadd.f32 %v724, %v458
    %v726 = vadd.f32 %v725, %v474
    %v727 = vadd.f32 %v726, %v490
    %v728 = vadd.f32 %v727, %v506
    %v729 = vadd.f32 %v728, %v522
    %v730 = vadd.f32 %v729, %v538
    %v731 = vadd.f32 %v730, %v554
    %v732 = vadd.f32 %v731, %v570
    %v733 = vadd.f32 %v732, %v586
    %v734 = vadd.f32 %v733, %v602
    %v735 = vadd.f32 %v734, %v618
    %v736 = vadd.f32 %v735, %v634
    %v737 = vadd.f32 %v395, %v411
    %v738 = vadd.f32 %v737, %v427
    %v739 = vadd.f32 %v738, %v443
    %v740 = vadd.f32 %v739, %v459
    %v741 = vadd.f32 %v740, %v475
    %v742 = vadd.f32 %v741, %v491
    %v743 = vadd.f32 %v742, %v507
    %v744 = vadd.f32 %v743, %v523
    %v745 = vadd.f32 %v744, %v539
    %v746 = vadd.f32 %v745, %v555
    %v747 = vadd.f32 %v746, %v571
    %v748 = vadd.f32 %v747, %v587
    %v749 = vadd.f32 %v748, %v603
    %v750 = vadd.f32 %v749, %v619
    %v751 = vadd.f32 %v750, %v635
    %v752 = vadd.f32 %v396, %v412
    %v753 = vadd.f32 %v752, %v428
    %v754 = vadd.f32 %v753, %v444
    %v755 = vadd.f32 %v754, %v460
    %v756 = vadd.f32 %v755, %v476
    %v757 = vadd.f32 %v756, %v492
    %v758 = vadd.f32 %v757, %v508
    %v759 = vadd.f32 %v758, %v524
    %v760 = vadd.f32 %v759, %v540
    %v761 = vadd.f32 %v760, %v556
    %v762 = vadd.f32 %v761, %v572
    %v763 = vadd.f32 %v762, %v588
    %v764 = vadd.f32 %v763, %v604
    %v765 = vadd.f32 %v764, %v620
    %v766 = vadd.f32 %v765, %v636
    %v767 = vadd.f32 %v397, %v413
    %v768 = vadd.f32 %v767, %v429
    %v769 = vadd.f32 %v768, %v445
    %v770 = vadd.f32 %v769, %v461
    %v771 = vadd.f32 %v770, %v477
    %v772 = vadd.f32 %v771, %v493
    %v773 = vadd.f32 %v772, %v509
    %v774 = vadd.f32 %v773, %v525
    %v775 = vadd.f32 %v774, %v541
    %v776 = vadd.f32 %v775, %v557
    %v777 = vadd.f32 %v776, %v573
    %v778 = vadd.f32 %v777, %v589
    %v779 = vadd.f32 %v778, %v605
    %v780 = vadd.f32 %v779, %v621
    %v781 = vadd.f32 %v780, %v637
    %v782 = vadd.f32 %v398, %v414
    %v783 = vadd.f32 %v782, %v430
    %v784 = vadd.f32 %v783, %v446
    %v785 = vadd.f32 %v784, %v462
    %v786 = vadd.f32 %v785, %v478
    %v787 = vadd.f32 %v786, %v494
    %v788 = vadd.f32 %v787, %v510
    %v789 = vadd.f32 %v788, %v526
    %v790 = vadd.f32 %v789, %v542
    %v791 = vadd.f32 %v790, %v558
    %v792 = vadd.f32 %v791, %v574
    %v793 = vadd.f32 %v792, %v590
    %v794 = vadd.f32 %v793, %v606
    %v795 = vadd.f32 %v794, %v622
    %v796 = vadd.f32 %v795, %v638
    %v797 = vadd.f32 %v399, %v415
    %v798 = vadd.f32 %v797, %v431
    %v799 = vadd.f32 %v798, %v447
    %v800 = vadd.f32 %v799, %v463
    %v801 = vadd.f32 %v800, %v479
    %v802 = vadd.f32 %v801, %v495
    %v803 = vadd.f32 %v802, %v511
    %v804 = vadd.f32 %v803, %v527
    %v805 = vadd.f32 %v804, %v543
    %v806 = vadd.f32 %v805, %v559
    %v807 = vadd.f32 %v806, %v575
    %v808 = vadd.f32 %v807, %v591
    %v809 = vadd.f32 %v808, %v607
    %v810 = vadd.f32 %v809, %v623
    %v811 = vadd.f32 %v810, %v639
    %v812 = vadd.f32 %v400, %v416
    %v813 = vadd.f32 %v812, %v432
    %v814 = vadd.f32 %v813, %v448
    %v815 = vadd.f32 %v814, %v464
    %v816 = vadd.f32 %v815, %v480
    %v817 = vadd.f32 %v816, %v496
    %v818 = vadd.f32 %v817, %v512
    %v819 = vadd.f32 %v818, %v528
    %v820 = vadd.f32 %v819, %v544
    %v821 = vadd.f32 %v820, %v560
    %v822 = vadd.f32 %v821, %v576
    %v823 = vadd.f32 %v822, %v592
    %v824 = vadd.f32 %v823, %v608
    %v825 = vadd.f32 %v824, %v624
    %v826 = vadd.f32 %v825, %v640
    %v827 = vadd.f32 %v401, %v417
    %v828 = vadd.f32 %v827, %v433
    %v829 = vadd.f32 %v828, %v449
    %v830 = vadd.f32 %v829, %v465
    %v831 = vadd.f32 %v830, %v481
    %v832 = vadd.f32 %v831, %v497
    %v833 = vadd.f32 %v832, %v513
    %v834 = vadd.f32 %v833, %v529
    %v835 = vadd.f32 %v834, %v545
    %v836 = vadd.f32 %v835, %v561
    %v837 = vadd.f32 %v836, %v577
    %v838 = vadd.f32 %v837, %v593
    %v839 = vadd.f32 %v838, %v609
    %v840 = vadd.f32 %v839, %v625
    %v841 = vadd.f32 %v840, %v641
    %v842 = vadd.f32 %v402, %v418
    %v843 = vadd.f32 %v842, %v434
    %v844 = vadd.f32 %v843, %v450
    %v845 = vadd.f32 %v844, %v466
    %v846 = vadd.f32 %v845, %v482
    %v847 = vadd.f32 %v846, %v498
    %v848 = vadd.f32 %v847, %v514
    %v849 = vadd.f32 %v848, %v530
    %v850 = vadd.f32 %v849, %v546
    %v851 = vadd.f32 %v850, %v562
    %v852 = vadd.f32 %v851, %v578
    %v853 = vadd.f32 %v852, %v594
    %v854 = vadd.f32 %v853, %v610
    %v855 = vadd.f32 %v854, %v626
    %v856 = vadd.f32 %v855, %v642
    %v857 = vadd.f32 %v403, %v419
    %v858 = vadd.f32 %v857, %v435
    %v859 = vadd.f32 %v858, %v451
    %v860 = vadd.f32 %v859, %v467
    %v861 = vadd.f32 %v860, %v483
    %v862 = vadd.f32 %v861, %v499
    %v863 = vadd.f32 %v862, %v515
    %v864 = vadd.f32 %v863, %v531
    %v865 = vadd.f32 %v864, %v547
    %v866 = vadd.f32 %v865, %v563
    %v867 = vadd.f32 %v866, %v579
    %v868 = vadd.f32 %v867, %v595
    %v869 = vadd.f32 %v868, %v611
    %v870 = vadd.f32 %v869, %v627
    %v871 = vadd.f32 %v870, %v643
    %v872 = vadd.f32 %v404, %v420
    %v873 = vadd.f32 %v872, %v436
    %v874 = vadd.f32 %v873, %v452
    %v875 = vadd.f32 %v874, %v468
    %v876 = vadd.f32 %v875, %v484
    %v877 = vadd.f32 %v876, %v500
    %v878 = vadd.f32 %v877, %v516
    %v879 = vadd.f32 %v878, %v532
    %v880 = vadd.f32 %v879, %v548
    %v881 = vadd.f32 %v880, %v564
    %v882 = vadd.f32 %v881, %v580
    %v883 = vadd.f32 %v882, %v596
    %v884 = vadd.f32 %v883, %v612
    %v885 = vadd.f32 %v884, %v628
    %v886 = vadd.f32 %v885, %v644
    %v887 = vadd.f32 %v405, %v421
    %v888 = vadd.f32 %v887, %v437
    %v889 = vadd.f32 %v888, %v453
    %v890 = vadd.f32 %v889, %v469
    %v891 = vadd.f32 %v890, %v485
    %v892 = vadd.f32 %v891, %v501
    %v893 = vadd.f32 %v892, %v517
    %v894 = vadd.f32 %v893, %v533
    %v895 = vadd.f32 %v894, %v549
    %v896 = vadd.f32 %v895, %v565
    %v897 = vadd.f32 %v896, %v581
    %v898 = vadd.f32 %v897, %v597
    %v899 = vadd.f32 %v898, %v613
    %v900 = vadd.f32 %v899, %v629
    %v901 = vadd.f32 %v900, %v645
    %v902 = vadd.f32 %v646, %v676
    %v903 = vadd.f32 %v647, %v691
    %v904 = vadd.f32 %v648, %v706
    %v905 = vadd.f32 %v649, %v721
    %v906 = vadd.f32 %v650, %v736
    %v907 = vadd.f32 %v651, %v751
    %v908 = vadd.f32 %v652, %v766
    %v909 = vadd.f32 %v653, %v781
    %v910 = vadd.f32 %v654, %v796
    %v911 = vadd.f32 %v655, %v811
    %v912 = vadd.f32 %v656, %v826
    %v913 = vadd.f32 %v657, %v841
    %v914 = vadd.f32 %v658, %v856
    %v915 = vadd.f32 %v659, %v871
    %v916 = vadd.f32 %v660, %v886
    %v917 = vadd.f32 %v661, %v901
    %918 = vst [vmem:[#allocation2] sm:$0xff] %v902
    %919 = vst [vmem:[#allocation2 + $0x8] sm:$0xff] %v903
    %920 = vst [vmem:[#allocation2 + $0x10] sm:$0xff] %v904
    %921 = vst [vmem:[#allocation2 + $0x18] sm:$0xff] %v905
    %922 = vst [vmem:[#allocation2 + $0x20] sm:$0xff] %v906
    %923 = vst [vmem:[#allocation2 + $0x28] sm:$0xff] %v907
    %924 = vst [vmem:[#allocation2 + $0x30] sm:$0xff] %v908
    %925 = vst [vmem:[#allocation2 + $0x38] sm:$0xff] %v909
    %926 = vst [vmem:[#allocation2 + $0x40] sm:$0xff] %v910
    %927 = vst [vmem:[#allocation2 + $0x48] sm:$0xff] %v911
    %928 = vst [vmem:[#allocation2 + $0x50] sm:$0xff] %v912
    %929 = vst [vmem:[#allocation2 + $0x58] sm:$0xff] %v913
    %930 = vst [vmem:[#allocation2 + $0x60] sm:$0xff] %v914
    %931 = vst [vmem:[#allocation2 + $0x68] sm:$0xff] %v915
    %932 = vst [vmem:[#allocation2 + $0x70] sm:$0xff] %v916
    %933 = vst [vmem:[#allocation2 + $0x78] sm:$0xff] %v917
    // Predicated region
    $region14: #{tpu_custom_call.1} parent=1 // pred_check
      %p934 = pneg %p30
    $region15: #{tpu_custom_call.1} parent=1 // pred_check_branch
      %936 = sbr.rel (%p934) target = $region17
    $region16: #{tpu_custom_call.1} parent=1 // pred_region
      %v937 = vld [vmem:[#allocation2] sm:$0xff]
      %v938 = vld [vmem:[#allocation2 + $0x8] sm:$0xff]
      %v939 = vld [vmem:[#allocation2 + $0x10] sm:$0xff]
      %v940 = vld [vmem:[#allocation2 + $0x18] sm:$0xff]
      %v941 = vld [vmem:[#allocation2 + $0x20] sm:$0xff]
      %v942 = vld [vmem:[#allocation2 + $0x28] sm:$0xff]
      %v943 = vld [vmem:[#allocation2 + $0x30] sm:$0xff]
      %v944 = vld [vmem:[#allocation2 + $0x38] sm:$0xff]
      %v945 = vld [vmem:[#allocation2 + $0x40] sm:$0xff]
      %v946 = vld [vmem:[#allocation2 + $0x48] sm:$0xff]
      %v947 = vld [vmem:[#allocation2 + $0x50] sm:$0xff]
      %v948 = vld [vmem:[#allocation2 + $0x58] sm:$0xff]
      %v949 = vld [vmem:[#allocation2 + $0x60] sm:$0xff]
      %v950 = vld [vmem:[#allocation2 + $0x68] sm:$0xff]
      %v951 = vld [vmem:[#allocation2 + $0x70] sm:$0xff]
      %v952 = vld [vmem:[#allocation2 + $0x78] sm:$0xff]
      %v953 = vadd.f32 %v937, %v938
      %v954 = vadd.f32 %v953, %v939
      %v955 = vadd.f32 %v954, %v940
      %v956 = vadd.f32 %v955, %v941
      %v957 = vadd.f32 %v956, %v942
      %v958 = vadd.f32 %v957, %v943
      %v959 = vadd.f32 %v958, %v944
      %v960 = vadd.f32 %v959, %v945
      %v961 = vadd.f32 %v960, %v946
      %v962 = vadd.f32 %v961, %v947
      %v963 = vadd.f32 %v962, %v948
      %v964 = vadd.f32 %v963, %v949
      %v965 = vadd.f32 %v964, %v950
      %v966 = vadd.f32 %v965, %v951
      %v967 = vadd.f32 %v966, %v952
      %968 = vadd.xlane.f32.xlu0 %v967
      %v969 = vpop.xlane.xlu0 %968
      %v970 = vrot.slane %v969, 4
      %v971 = vadd.f32 %v969, %v970
      %v972 = vrot.slane %v971, 2
      %v973 = vadd.f32 %v971, %v972
      %v974 = vrot.slane %v973, 1
      %v975 = vadd.f32 %v973, %v974
      %s976 = vtos %v975
      %s977 = scalar_lea.smem [#allocation6], 0
      %978 = sst [smem:[%s977]] %s976
    $region17: #{tpu_custom_call.1} parent=1 // pred_fallthru
      _
    // Predicated region
    $region18: #{tpu_custom_call.1} parent=1 // pred_check
      _
    $region19: #{tpu_custom_call.1} parent=1 // pred_check_branch
      %980 = sbr.rel (0) target = $region21
    $region20: #{tpu_custom_call.1} parent=1 // pred_region
      %s982 = ssub.s32 16, 16
      %983 = vsyncadd [#allocation5], %s982
      %986 = dma.smem_to_hbm [#allocation6], 16, %s1, [#allocation5]
    $region21: #{tpu_custom_call.1} parent=1 // pred_fallthru
      _
    // Predicated region
    $region22: #{tpu_custom_call.1} parent=1 // pred_check
      _
    $region23: #{tpu_custom_call.1} parent=1 // pred_check_branch
      %988 = sbr.rel (0) target = $region25
    $region24: #{tpu_custom_call.1} parent=1 // pred_region
      %989 = dma.done [#allocation5], 16
    $region25: #{tpu_custom_call.1} parent=1 // pred_fallthru
      _
    %990 = sfence
    %991 = vsyncpa [#allocation4], 1
    %992 = vsyncpa [#allocation5], 1

</llo_original>
